<compile_context>
chip_gen: v7x
topology: tpu7x:2x2x1
jax: 0.10.0
libtpu: 0.0.40
codegen_flags: <defaults>
</compile_context>

<pallas_src>
import jax
import jax.numpy as jnp
from jax.experimental import pallas as pl
from jax.experimental.pallas import tpu as pltpu


def _fused_elementwise_kernel(x_ref, m_ref, o_ref):
    x = x_ref[...]
    m = m_ref[...]
    # Folded scalar algebra: 0.5*x*2*m + 3*(9*m) == m*(x + 27)
    poly = m * (x + 27.0)
    gate = jax.lax.erf(7.0 * m) + 1.0
    o_ref[...] = poly * gate


def _pick_lanes(total):
    """Pick a lane-dense (multiple of 128) last dim dividing `total`.

    Prefers 8 rows x (total // 8) lanes when that keeps lanes a modest
    multiple of 128 (fully-packed vregs, unmasked stores). Falls back to a
    padded 128-lane layout for arbitrary sizes.
    """
    if total % (8 * 128) == 0:
        lanes = total // 8
        if lanes % 128 == 0 and lanes <= 16384:
            return lanes, 0
    for lanes in (2048, 1536, 1024, 512, 256, 128):
        if total % lanes == 0:
            return lanes, 0
    lanes = 128
    rows = -(-total // lanes)
    return lanes, rows * lanes - total


def fused_model(input_tensor, mlp_input_tensor):
    assert input_tensor.shape == mlp_input_tensor.shape
    orig_shape = input_tensor.shape
    dtype = input_tensor.dtype

    total = 1
    for s in orig_shape:
        total *= s

    lanes, pad = _pick_lanes(total)
    rows = (total + pad) // lanes

    if pad == 0:
        x_flat = input_tensor.reshape(rows, lanes)
        m_flat = mlp_input_tensor.reshape(rows, lanes)
    else:
        # TODO(synk): replace wrapper-side pad with an in-kernel masked tail
        # if non-divisible shapes ever become the common case.
        x_flat = jnp.pad(input_tensor.reshape(-1), (0, pad)).reshape(rows, lanes)
        m_flat = jnp.pad(mlp_input_tensor.reshape(-1), (0, pad)).reshape(rows, lanes)

    itemsize = jnp.dtype(dtype).itemsize
    out_flat = pl.pallas_call(
        _fused_elementwise_kernel,
        out_shape=jax.ShapeDtypeStruct((rows, lanes), dtype),
        # Whole-array VMEM blocks, no grid: single invocation, no pipelining
        # machinery, no double-buffering for a problem this small.
        in_specs=[
            pl.BlockSpec(memory_space=pltpu.MemorySpace.VMEM),
            pl.BlockSpec(memory_space=pltpu.MemorySpace.VMEM),
        ],
        out_specs=pl.BlockSpec(memory_space=pltpu.MemorySpace.VMEM),
        cost_estimate=pl.CostEstimate(
            flops=5 * total,
            transcendentals=total,
            bytes_accessed=3 * total * itemsize,
        ),
    )(x_flat, m_flat)

    if pad == 0:
        return out_flat.reshape(orig_shape)
    return out_flat.reshape(-1)[:total].reshape(orig_shape)


def _reference(x, m):
    # Literal translation of the original PyTorch forward.
    v0 = x * 0.5
    v1 = 2.0 * m
    v2 = v0 * v1
    v3 = 9.0 * m
    v4 = 3.0 * v3
    v5 = v2 + v4
    v6 = 7.0 * m
    v7 = jax.lax.erf(v6)
    v8 = v7 + 1.0
    return v5 * v8


if __name__ == "__main__":
    key = jax.random.PRNGKey(0)
    k1, k2 = jax.random.split(key)
    # Shapes from the module: (1, 3, 64, 64) NCHW, float32.
    x = jax.random.normal(k1, (1, 3, 64, 64), dtype=jnp.float32)
    m = jax.random.normal(k2, (1, 3, 64, 64), dtype=jnp.float32)

    out = fused_model(x, m)
    out = jax.block_until_ready(out)

    ref = _reference(x, m)
    assert out.shape == (1, 3, 64, 64)
    assert jnp.allclose(out, ref, atol=1e-5, rtol=1e-5)

    print("KERNEL_OK")
</pallas_src>

<mosaic_0001>
module attributes {stable_mosaic.version = 11 : i64} {
  func.func @_fused_elementwise_kernel(%arg0: memref<8x1536xf32, #tpu.memory_space<vmem>>, %arg1: memref<8x1536xf32, #tpu.memory_space<vmem>>, %arg2: memref<8x1536xf32, #tpu.memory_space<vmem>>) attributes {dimension_semantics = [], scalar_prefetch = 0 : i64, scratch_operands = 0 : i64, tpu.core_type = #tpu.core_type<tc>} {
    %c0 = arith.constant 0 : index
    %c0_0 = arith.constant 0 : index
    %0 = vector.load %arg0[%c0, %c0_0] : memref<8x1536xf32, #tpu.memory_space<vmem>>, vector<8x1536xf32>
    %c0_1 = arith.constant 0 : index
    %c0_2 = arith.constant 0 : index
    %1 = vector.load %arg1[%c0_1, %c0_2] : memref<8x1536xf32, #tpu.memory_space<vmem>>, vector<8x1536xf32>
    %cst = arith.constant 2.700000e+01 : f32
    %2 = vector.broadcast %cst : f32 to vector<8x1536xf32>
    %3 = arith.addf %0, %2 : vector<8x1536xf32>
    %4 = arith.mulf %1, %3 : vector<8x1536xf32>
    %cst_3 = arith.constant 7.000000e+00 : f32
    %5 = vector.broadcast %cst_3 : f32 to vector<8x1536xf32>
    %6 = arith.mulf %5, %1 : vector<8x1536xf32>
    %7 = math.erf %6 : vector<8x1536xf32>
    %cst_4 = arith.constant 1.000000e+00 : f32
    %8 = vector.broadcast %cst_4 : f32 to vector<8x1536xf32>
    %9 = arith.addf %7, %8 : vector<8x1536xf32>
    %10 = arith.mulf %4, %9 : vector<8x1536xf32>
    %c0_5 = arith.constant 0 : index
    %c0_6 = arith.constant 0 : index
    %11 = vector.load %arg2[%c0_5, %c0_6] : memref<8x1536xf32, #tpu.memory_space<vmem>>, vector<8x1536xf32>
    tpu.vector_store %arg2[%c0_5, %c0_6], %10 {strides = array<i32>} : memref<8x1536xf32, #tpu.memory_space<vmem>>, vector<8x1536xf32>,
    return
  }
}

</mosaic_0001>

<llo_original>
// kernel: tpu_custom_call.1
$region0: #{tpu_custom_call.1}
  #allocation0 [shape = 'u32[]', space=smem, size = 0x4, offset = 0x4, fixed_abs, tag = 'smem constant byte address 0x4 - core index']
  #allocation1 [shape = 'u32[144,128]{1,0:T(1,128)}', space=vmem, size = 0x12000, scoped, tag = 'internal scratch']
  %s0 = inlined_call_operand.hbm [shape: f32[8,1536], index: 0, kind: input, shape index: {}]
  %s1 = inlined_call_operand.hbm [shape: f32[8,1536], index: 1, kind: input, shape index: {}]
  %s2 = inlined_call_operand.hbm [shape: f32[8,1536], index: 2, kind: output, shape index: {}]
  %s3 = sld [smem:[#allocation0]]
  $region26: #{tpu_custom_call.1} parent=0
    _
  %s5 = ssub.s32 1, %s3
  %s6 = scalar_select 0, %s5, %s3
  $region1: #{tpu_custom_call.1} parent=0
    #allocation2 [shape = 'u8[49152]{0}', space=vmem, size = 0xc000, scoped, tag = 'input window, operand 0, single buffered']
    #allocation3 [shape = 's32[1]{0}', space=sflag, size = 0x4, scoped, tag = 'scoped memory for tpu_custom_call.1']
    #allocation4 [shape = 's32[1]{0}', space=sflag, size = 0x4, scoped, tag = 'scoped memory for tpu_custom_call.1']
    #allocation5 [shape = 'u8[49152]{0}', space=vmem, size = 0xc000, scoped, tag = 'input window, operand 1, single buffered']
    #allocation6 [shape = 's32[1]{0}', space=sflag, size = 0x4, scoped, tag = 'scoped memory for tpu_custom_call.1']
    #allocation7 [shape = 'u8[49152]{0}', space=vmem, size = 0xc000, scoped, tag = 'output window, operand 0, single buffered']
    %7 = vsyncpa [#allocation3], 0
    %8 = vsyncpa [#allocation6], 0
    %9 = vsyncpa [#allocation4], 0
    // Predicated region
    $region2: #{tpu_custom_call.1} parent=1 // pred_check
      _
    $region3: #{tpu_custom_call.1} parent=1 // pred_check_branch
      %11 = sbr.rel (0) target = $region5
    $region4: #{tpu_custom_call.1} parent=1 // pred_region
      %s13 = ssub.s32 1536, 1536
      %14 = vsyncadd [#allocation3], %s13
      %s16 = sshll.u32 [#allocation2], 4
      %s17 = int_to_ptr.vmem [resolvable:$true] %s16
      %19 = dma.hbm_to_vmem [thread:$0]  %s0, 1536, %s17, [#allocation3]
    $region5: #{tpu_custom_call.1} parent=1 // pred_fallthru
      _
    // Predicated region
    $region6: #{tpu_custom_call.1} parent=1 // pred_check
      _
    $region7: #{tpu_custom_call.1} parent=1 // pred_check_branch
      %21 = sbr.rel (0) target = $region9
    $region8: #{tpu_custom_call.1} parent=1 // pred_region
      %s23 = ssub.s32 1536, 1536
      %24 = vsyncadd [#allocation6], %s23
      %s26 = sshll.u32 [#allocation5], 4
      %s27 = int_to_ptr.vmem [resolvable:$true] %s26
      %29 = dma.hbm_to_vmem [thread:$0]  %s1, 1536, %s27, [#allocation6]
    $region9: #{tpu_custom_call.1} parent=1 // pred_fallthru
      _
    // Predicated region
    $region10: #{tpu_custom_call.1} parent=1 // pred_check
      _
    $region11: #{tpu_custom_call.1} parent=1 // pred_check_branch
      %31 = sbr.rel (0) target = $region13
    $region12: #{tpu_custom_call.1} parent=1 // pred_region
      %32 = dma.done [#allocation3], 1536
    $region13: #{tpu_custom_call.1} parent=1 // pred_fallthru
      _
    // Predicated region
    $region14: #{tpu_custom_call.1} parent=1 // pred_check
      _
    $region15: #{tpu_custom_call.1} parent=1 // pred_check_branch
      %34 = sbr.rel (0) target = $region17
    $region16: #{tpu_custom_call.1} parent=1 // pred_region
      %35 = dma.done [#allocation6], 1536
    $region17: #{tpu_custom_call.1} parent=1 // pred_fallthru
      _
    %v36 = vld [vmem:[#allocation2] sm:$0xff]
    %v37 = vld [vmem:[#allocation2 + $0x8] sm:$0xff]
    %v38 = vld [vmem:[#allocation2 + $0x10] sm:$0xff]
    %v39 = vld [vmem:[#allocation2 + $0x18] sm:$0xff]
    %v40 = vld [vmem:[#allocation2 + $0x20] sm:$0xff]
    %v41 = vld [vmem:[#allocation2 + $0x28] sm:$0xff]
    %v42 = vld [vmem:[#allocation2 + $0x30] sm:$0xff]
    %v43 = vld [vmem:[#allocation2 + $0x38] sm:$0xff]
    %v44 = vld [vmem:[#allocation2 + $0x40] sm:$0xff]
    %v45 = vld [vmem:[#allocation2 + $0x48] sm:$0xff]
    %v46 = vld [vmem:[#allocation2 + $0x50] sm:$0xff]
    %v47 = vld [vmem:[#allocation2 + $0x58] sm:$0xff]
    %v48 = vld [vmem:[#allocation5] sm:$0xff]
    %v49 = vld [vmem:[#allocation5 + $0x8] sm:$0xff]
    %v50 = vld [vmem:[#allocation5 + $0x10] sm:$0xff]
    %v51 = vld [vmem:[#allocation5 + $0x18] sm:$0xff]
    %v52 = vld [vmem:[#allocation5 + $0x20] sm:$0xff]
    %v53 = vld [vmem:[#allocation5 + $0x28] sm:$0xff]
    %v54 = vld [vmem:[#allocation5 + $0x30] sm:$0xff]
    %v55 = vld [vmem:[#allocation5 + $0x38] sm:$0xff]
    %v56 = vld [vmem:[#allocation5 + $0x40] sm:$0xff]
    %v57 = vld [vmem:[#allocation5 + $0x48] sm:$0xff]
    %v58 = vld [vmem:[#allocation5 + $0x50] sm:$0xff]
    %v59 = vld [vmem:[#allocation5 + $0x58] sm:$0xff]
    %v60 = vadd.f32 %v36, 27.0
    %v61 = vadd.f32 %v37, 27.0
    %v62 = vadd.f32 %v38, 27.0
    %v63 = vadd.f32 %v39, 27.0
    %v64 = vadd.f32 %v40, 27.0
    %v65 = vadd.f32 %v41, 27.0
    %v66 = vadd.f32 %v42, 27.0
    %v67 = vadd.f32 %v43, 27.0
    %v68 = vadd.f32 %v44, 27.0
    %v69 = vadd.f32 %v45, 27.0
    %v70 = vadd.f32 %v46, 27.0
    %v71 = vadd.f32 %v47, 27.0
    %v72 = vmul.f32 %v48, %v60
    %v73 = vmul.f32 %v49, %v61
    %v74 = vmul.f32 %v50, %v62
    %v75 = vmul.f32 %v51, %v63
    %v76 = vmul.f32 %v52, %v64
    %v77 = vmul.f32 %v53, %v65
    %v78 = vmul.f32 %v54, %v66
    %v79 = vmul.f32 %v55, %v67
    %v80 = vmul.f32 %v56, %v68
    %v81 = vmul.f32 %v57, %v69
    %v82 = vmul.f32 %v58, %v70
    %v83 = vmul.f32 %v59, %v71
    %v84 = vmul.f32 %v48, 7.0
    %v85 = vmul.f32 %v49, 7.0
    %v86 = vmul.f32 %v50, 7.0
    %v87 = vmul.f32 %v51, 7.0
    %v88 = vmul.f32 %v52, 7.0
    %v89 = vmul.f32 %v53, 7.0
    %v90 = vmul.f32 %v54, 7.0
    %v91 = vmul.f32 %v55, 7.0
    %v92 = vmul.f32 %v56, 7.0
    %v93 = vmul.f32 %v57, 7.0
    %v94 = vmul.f32 %v58, 7.0
    %v95 = vmul.f32 %v59, 7.0
    %v96 = verf.f32.pop %v84
    %v97 = verf.f32.pop %v85
    %v98 = verf.f32.pop %v86
    %v99 = verf.f32.pop %v87
    %v100 = verf.f32.pop %v88
    %v101 = verf.f32.pop %v89
    %v102 = verf.f32.pop %v90
    %v103 = verf.f32.pop %v91
    %v104 = verf.f32.pop %v92
    %v105 = verf.f32.pop %v93
    %v106 = verf.f32.pop %v94
    %v107 = verf.f32.pop %v95
    %v108 = vadd.f32 %v96, 1.0
    %v109 = vadd.f32 %v97, 1.0
    %v110 = vadd.f32 %v98, 1.0
    %v111 = vadd.f32 %v99, 1.0
    %v112 = vadd.f32 %v100, 1.0
    %v113 = vadd.f32 %v101, 1.0
    %v114 = vadd.f32 %v102, 1.0
    %v115 = vadd.f32 %v103, 1.0
    %v116 = vadd.f32 %v104, 1.0
    %v117 = vadd.f32 %v105, 1.0
    %v118 = vadd.f32 %v106, 1.0
    %v119 = vadd.f32 %v107, 1.0
    %v120 = vmul.f32 %v72, %v108
    %v121 = vmul.f32 %v73, %v109
    %v122 = vmul.f32 %v74, %v110
    %v123 = vmul.f32 %v75, %v111
    %v124 = vmul.f32 %v76, %v112
    %v125 = vmul.f32 %v77, %v113
    %v126 = vmul.f32 %v78, %v114
    %v127 = vmul.f32 %v79, %v115
    %v128 = vmul.f32 %v80, %v116
    %v129 = vmul.f32 %v81, %v117
    %v130 = vmul.f32 %v82, %v118
    %v131 = vmul.f32 %v83, %v119
    %132 = vst [vmem:[#allocation7] sm:$0xff] %v120
    %133 = vst [vmem:[#allocation7 + $0x8] sm:$0xff] %v121
    %134 = vst [vmem:[#allocation7 + $0x10] sm:$0xff] %v122
    %135 = vst [vmem:[#allocation7 + $0x18] sm:$0xff] %v123
    %136 = vst [vmem:[#allocation7 + $0x20] sm:$0xff] %v124
    %137 = vst [vmem:[#allocation7 + $0x28] sm:$0xff] %v125
    %138 = vst [vmem:[#allocation7 + $0x30] sm:$0xff] %v126
    %139 = vst [vmem:[#allocation7 + $0x38] sm:$0xff] %v127
    %140 = vst [vmem:[#allocation7 + $0x40] sm:$0xff] %v128
    %141 = vst [vmem:[#allocation7 + $0x48] sm:$0xff] %v129
    %142 = vst [vmem:[#allocation7 + $0x50] sm:$0xff] %v130
    %143 = vst [vmem:[#allocation7 + $0x58] sm:$0xff] %v131
    // Predicated region
    $region18: #{tpu_custom_call.1} parent=1 // pred_check
      _
    $region19: #{tpu_custom_call.1} parent=1 // pred_check_branch
      %145 = sbr.rel (0) target = $region21
    $region20: #{tpu_custom_call.1} parent=1 // pred_region
      %s147 = ssub.s32 1536, 1536
      %148 = vsyncadd [#allocation4], %s147
      %s150 = sshll.u32 [#allocation7], 4
      %s151 = int_to_ptr.vmem [resolvable:$true] %s150
      %153 = dma.vmem_to_hbm [thread:$0]  %s151, 1536, %s2, [#allocation4]
    $region21: #{tpu_custom_call.1} parent=1 // pred_fallthru
      _
    // Predicated region
    $region22: #{tpu_custom_call.1} parent=1 // pred_check
      _
    $region23: #{tpu_custom_call.1} parent=1 // pred_check_branch
      %155 = sbr.rel (0) target = $region25
    $region24: #{tpu_custom_call.1} parent=1 // pred_region
      %156 = dma.done [#allocation4], 1536
    $region25: #{tpu_custom_call.1} parent=1 // pred_fallthru
      _
    %157 = vsyncpa [#allocation3], 1
    %158 = vsyncpa [#allocation6], 1
    %159 = vsyncpa [#allocation4], 1

</llo_original>
